<compile_context>
chip_gen: v7x
topology: tpu7x:2x2x1
jax: 0.10.0
libtpu: 0.0.40
codegen_flags: <defaults>
</compile_context>

<pallas_src>
import functools

import jax
import jax.numpy as jnp
import numpy as np
from jax.experimental import pallas as pl
from jax.experimental.pallas import tpu as pltpu

LANE = 128      # lane width (final output dim alignment for unmasked vst)
SUBLANE = 8     # sublane count (batch / K alignment)


def _round_up(x, m):
    return ((x + m - 1) // m) * m


def _zero_index_map(ndim):
    # Helper avoids late-binding lambdas closing over loop variables.
    return lambda i: (0,) * ndim


# ----------------------------- Pallas kernel ---------------------------------


def _fused_mlp_kernel(layer_out_widths, *refs):
    """All-agents block-diagonal MLP in one grid step.

    refs = (x_ref, w_0, ..., w_{L-1}, b_all_ref, out_ref)
      x_ref     : (B_pad, K_0)        f32, agents' inputs concatenated on lanes
      w_l       : (K_l, N_l)          f32, block-diagonal across agents, pre-transposed
      b_all_ref : (L, 1, N_max)       f32, per-layer biases, zero-padded on lanes
      out_ref   : (B_pad, N_{L-1})    f32, lane-dense (multiple of 128) -> unmasked vst
    """
    n_layers = len(layer_out_widths)
    x_ref = refs[0]
    w_refs = refs[1:1 + n_layers]
    b_ref = refs[1 + n_layers]
    out_ref = refs[-1]

    h = x_ref[...]                                   # (B_pad, K_0) f32
    for l in range(n_layers):
        n_l = layer_out_widths[l]
        w = w_refs[l][...]                           # (K_l, N_l)
        b = b_ref[l][:, :n_l]                        # (1, N_l) static slice
        h = jnp.dot(h, w, preferred_element_type=jnp.float32) + b
        if l < n_layers - 1:
            h = jnp.maximum(h, 0.0)                  # ReLU between layers only
    out_ref[...] = h                                 # one full-lane store


# --------------------------- parameter construction ---------------------------


def orthogonal_linear_params(key, in_size, out_size, gain=np.sqrt(2.0)):
    """nn.Linear params: orthogonal_(gain=sqrt(2)) weight (out, in), zero bias."""
    w = jax.nn.initializers.orthogonal(scale=gain)(key, (out_size, in_size), jnp.float32)
    b = jnp.zeros((out_size,), jnp.float32)
    return w, b


def build_multi_agent_params(key, input_sizes, hidden_dims, output_sizes):
    """Build parameters once.

    Returns:
      packed: dict with block-diagonal, pre-transposed, lane-consolidated kernel params.
      raw:    list of per-agent ([W_i (out,in)], [b_i (out,)]) for the reference check.
    """
    n_agents = len(input_sizes)
    n_layers = len(hidden_dims) + 1

    # Raw PyTorch-layout parameters (for the reference check).
    raw = []
    for in_size, out_size in zip(input_sizes, output_sizes):
        dims = [in_size] + list(hidden_dims) + [out_size]
        ws, bs = [], []
        for d_in, d_out in zip(dims[:-1], dims[1:]):
            key, sub = jax.random.split(key)
            w, b = orthogonal_linear_params(sub, d_in, d_out)
            ws.append(w)
            bs.append(b)
        raw.append((ws, bs))

    # Block-diagonal packing: per-boundary concatenated widths (native, 8-rounded),
    # final boundary lane-padded to 128 for an unmasked output store.
    per_agent_dims = [[i] + list(hidden_dims) + [o] for i, o in zip(input_sizes, output_sizes)]
    widths, offsets = [], []
    for li in range(n_layers + 1):
        sizes = [d[li] for d in per_agent_dims]
        offsets.append(np.cumsum([0] + sizes).tolist())          # per-agent column start
        total = sum(sizes)
        widths.append(_round_up(total, LANE if li == n_layers else SUBLANE))

    n_max = max(widths[1:])
    b_all = np.zeros((n_layers, 1, n_max), np.float32)
    w_mats = []
    for li in range(n_layers):
        k_pad, n_pad = widths[li], widths[li + 1]
        w_bd = np.zeros((k_pad, n_pad), np.float32)
        for ai, (ws, bs) in enumerate(raw):
            w = np.asarray(ws[li])                                # (out, in)
            r0, c0 = offsets[li][ai], offsets[li + 1][ai]
            w_bd[r0:r0 + w.shape[1], c0:c0 + w.shape[0]] = w.T    # -> (in, out), block-diag
            b_all[li, 0, c0:c0 + w.shape[0]] = np.asarray(bs[li])
        w_mats.append(jnp.asarray(w_bd))

    packed = dict(
        w_mats=w_mats,                       # list of (K_l, N_l) f32
        b_all=jnp.asarray(b_all),            # (L, 1, N_max) f32
        widths=widths,                       # packed boundary widths
        layer_out_widths=tuple(widths[1:]),
        out_offsets=offsets[-1],             # per-agent output column starts (unpadded)
        input_sizes=list(input_sizes),
        output_sizes=list(output_sizes),
    )
    return packed, raw


# ------------------------------- forward pass ---------------------------------


def make_forward(packed):
    """Returns forward(inputs, hiddens) -> (outs, hiddens), jitted end-to-end."""
    widths = packed["widths"]
    layer_out_widths = packed["layer_out_widths"]
    out_offsets = packed["out_offsets"]
    output_sizes = packed["output_sizes"]
    in_total = sum(packed["input_sizes"])
    kernel = functools.partial(_fused_mlp_kernel, layer_out_widths)

    def _impl(inputs, w_mats, b_all):
        batch = inputs[0].shape[0]
        b_pad = _round_up(max(batch, 1), SUBLANE)

        # Concatenate agents' inputs along the lane axis; zero-pad (exact).
        x_cat = jnp.concatenate([jnp.asarray(x, jnp.float32) for x in inputs], axis=-1)
        x_cat = jnp.pad(x_cat, ((0, b_pad - batch), (0, widths[0] - in_total)))

        args = [x_cat] + list(w_mats) + [b_all]
        in_specs = [pl.BlockSpec(a.shape, _zero_index_map(a.ndim)) for a in args]
        out_specs = pl.BlockSpec((b_pad, widths[-1]), _zero_index_map(2))

        out = pl.pallas_call(
            kernel,
            out_shape=jax.ShapeDtypeStruct((b_pad, widths[-1]), jnp.float32),
            grid=(1,),                                   # single fused step
            in_specs=in_specs,
            out_specs=out_specs,
            compiler_params=pltpu.CompilerParams(dimension_semantics=("arbitrary",)),
        )(*args)

        # Per-agent output slicing fused into the same jit.
        return tuple(
            out[:batch, out_offsets[ai]:out_offsets[ai] + output_sizes[ai]]
            for ai in range(len(output_sizes))
        )

    jitted = jax.jit(_impl)

    def forward(inputs, hiddens=None):
        n_agents = len(inputs)
        if hiddens is None:
            hiddens = [None] * n_agents
        outs = jitted(tuple(inputs), tuple(packed["w_mats"]), packed["b_all"])
        return list(outs), [None] * n_agents        # FCNetwork.forward returns (y, None)

    return forward


# ---------------------------------- main --------------------------------------

if __name__ == "__main__":
    # Small shapes consistent with the module: 2 agents, 2 hidden layers of 32.
    input_sizes = [12, 10]
    hidden_dims = [32, 32]
    output_sizes = [5, 6]
    batch = 4

    key = jax.random.PRNGKey(0)
    pkey, xkey0, xkey1 = jax.random.split(key, 3)

    packed, raw_params = build_multi_agent_params(
        pkey, input_sizes, hidden_dims, output_sizes
    )
    forward = make_forward(packed)

    inputs = [
        jax.random.normal(xkey0, (batch, input_sizes[0]), jnp.float32),
        jax.random.normal(xkey1, (batch, input_sizes[1]), jnp.float32),
    ]

    outs, hiddens = forward(inputs)
    outs = [jax.block_until_ready(o) for o in outs]

    # Pure-JAX reference check (same math on the unpadded per-agent params, no Pallas).
    for x, (ws, bs), o in zip(inputs, raw_params, outs):
        h = x
        for i, (w, b) in enumerate(zip(ws, bs)):
            h = h @ w.T + b
            if i < len(ws) - 1:
                h = jnp.maximum(h, 0.0)
        np.testing.assert_allclose(np.asarray(o), np.asarray(h), rtol=1e-5, atol=1e-5)

    assert all(h is None for h in hiddens)
    assert outs[0].shape == (batch, output_sizes[0])
    assert outs[1].shape == (batch, output_sizes[1])
    print("KERNEL_OK")
</pallas_src>

<mosaic_0001>
module attributes {stable_mosaic.version = 11 : i64} {
  func.func @_fused_mlp_kernel(%arg0: i32, %arg1: memref<8x24xf32, #tpu.memory_space<vmem>>, %arg2: memref<24x64xf32, #tpu.memory_space<vmem>>, %arg3: memref<64x64xf32, #tpu.memory_space<vmem>>, %arg4: memref<64x128xf32, #tpu.memory_space<vmem>>, %arg5: memref<3x1x128xf32, #tpu.memory_space<vmem>>, %arg6: memref<8x128xf32, #tpu.memory_space<vmem>>) attributes {dimension_semantics = [#tpu.dimension_semantics<arbitrary>], iteration_bounds = array<i64: 1>, scalar_prefetch = 0 : i64, scratch_operands = 0 : i64, tpu.core_type = #tpu.core_type<tc>, window_params = [{pipeline_mode = #tpu.pipeline_mode<synchronous>, transform_indices = @transform_0, window_bounds = array<i64: 8, 24>}, {pipeline_mode = #tpu.pipeline_mode<synchronous>, transform_indices = @transform_1, window_bounds = array<i64: 24, 64>}, {pipeline_mode = #tpu.pipeline_mode<synchronous>, transform_indices = @transform_2, window_bounds = array<i64: 64, 64>}, {pipeline_mode = #tpu.pipeline_mode<synchronous>, transform_indices = @transform_3, window_bounds = array<i64: 64, 128>}, {pipeline_mode = #tpu.pipeline_mode<synchronous>, transform_indices = @transform_4, window_bounds = array<i64: 3, 1, 128>}, {pipeline_mode = #tpu.pipeline_mode<synchronous>, transform_indices = @transform_5, window_bounds = array<i64: 8, 128>}]} {
    %c0 = arith.constant 0 : index
    %c0_0 = arith.constant 0 : index
    %0 = vector.load %arg1[%c0, %c0_0] : memref<8x24xf32, #tpu.memory_space<vmem>>, vector<8x24xf32>
    %c0_1 = arith.constant 0 : index
    %c0_2 = arith.constant 0 : index
    %1 = vector.load %arg2[%c0_1, %c0_2] : memref<24x64xf32, #tpu.memory_space<vmem>>, vector<24x64xf32>
    %c0_3 = arith.constant 0 : index
    %c0_4 = arith.constant 0 : index
    %c0_5 = arith.constant 0 : index
    %2 = vector.load %arg5[%c0_3, %c0_4, %c0_5] : memref<3x1x128xf32, #tpu.memory_space<vmem>>, vector<1x1x128xf32>
    %3 = vector.shape_cast %2 : vector<1x1x128xf32> to vector<1x128xf32>
    %4 = vector.extract_strided_slice %3 {offsets = [0, 0], sizes = [1, 64], strides = [1, 1]} : vector<1x128xf32> to vector<1x64xf32>
    %cst = arith.constant dense<0.000000e+00> : vector<8x64xf32>
    %5 = tpu.matmul %0, %1, %cst {dimension_numbers = #tpu.dot_dimension_numbers<[1], [0], [0], [1], [0, 0, 1, 1], [], []>} : vector<8x24xf32>, vector<24x64xf32>, vector<8x64xf32> -> vector<8x64xf32>
    %6 = vector.broadcast %4 : vector<1x64xf32> to vector<8x64xf32>
    %7 = arith.addf %5, %6 : vector<8x64xf32>
    %cst_6 = arith.constant 0.000000e+00 : f32
    %8 = vector.broadcast %cst_6 : f32 to vector<8x64xf32>
    %9 = arith.maximumf %7, %8 : vector<8x64xf32>
    %c0_7 = arith.constant 0 : index
    %c0_8 = arith.constant 0 : index
    %10 = vector.load %arg3[%c0_7, %c0_8] : memref<64x64xf32, #tpu.memory_space<vmem>>, vector<64x64xf32>
    %c1 = arith.constant 1 : index
    %c0_9 = arith.constant 0 : index
    %c0_10 = arith.constant 0 : index
    %11 = vector.load %arg5[%c1, %c0_9, %c0_10] : memref<3x1x128xf32, #tpu.memory_space<vmem>>, vector<1x1x128xf32>
    %12 = vector.shape_cast %11 : vector<1x1x128xf32> to vector<1x128xf32>
    %13 = vector.extract_strided_slice %12 {offsets = [0, 0], sizes = [1, 64], strides = [1, 1]} : vector<1x128xf32> to vector<1x64xf32>
    %cst_11 = arith.constant dense<0.000000e+00> : vector<8x64xf32>
    %14 = tpu.matmul %9, %10, %cst_11 {dimension_numbers = #tpu.dot_dimension_numbers<[1], [0], [0], [1], [0, 0, 1, 1], [], []>} : vector<8x64xf32>, vector<64x64xf32>, vector<8x64xf32> -> vector<8x64xf32>
    %15 = vector.broadcast %13 : vector<1x64xf32> to vector<8x64xf32>
    %16 = arith.addf %14, %15 : vector<8x64xf32>
    %cst_12 = arith.constant 0.000000e+00 : f32
    %17 = vector.broadcast %cst_12 : f32 to vector<8x64xf32>
    %18 = arith.maximumf %16, %17 : vector<8x64xf32>
    %c0_13 = arith.constant 0 : index
    %c0_14 = arith.constant 0 : index
    %19 = vector.load %arg4[%c0_13, %c0_14] : memref<64x128xf32, #tpu.memory_space<vmem>>, vector<64x128xf32>
    %c2 = arith.constant 2 : index
    %c0_15 = arith.constant 0 : index
    %c0_16 = arith.constant 0 : index
    %20 = vector.load %arg5[%c2, %c0_15, %c0_16] : memref<3x1x128xf32, #tpu.memory_space<vmem>>, vector<1x1x128xf32>
    %21 = vector.shape_cast %20 : vector<1x1x128xf32> to vector<1x128xf32>
    %cst_17 = arith.constant dense<0.000000e+00> : vector<8x128xf32>
    %22 = tpu.matmul %18, %19, %cst_17 {dimension_numbers = #tpu.dot_dimension_numbers<[1], [0], [0], [1], [0, 0, 1, 1], [], []>} : vector<8x64xf32>, vector<64x128xf32>, vector<8x128xf32> -> vector<8x128xf32>
    %23 = vector.broadcast %21 : vector<1x128xf32> to vector<8x128xf32>
    %24 = arith.addf %22, %23 : vector<8x128xf32>
    %c0_18 = arith.constant 0 : index
    %c0_19 = arith.constant 0 : index
    %25 = vector.load %arg6[%c0_18, %c0_19] : memref<8x128xf32, #tpu.memory_space<vmem>>, vector<8x128xf32>
    tpu.vector_store %arg6[%c0_18, %c0_19], %24 {strides = array<i32>} : memref<8x128xf32, #tpu.memory_space<vmem>>, vector<8x128xf32>,
    return
  }
  func.func @transform_0(%arg0: i32) -> (i32, i32) {
    %c0_i32 = arith.constant 0 : i32
    %c0_i32_0 = arith.constant 0 : i32
    %c0_i32_1 = arith.constant 0 : i32
    return %c0_i32, %c0_i32_0 : i32, i32
  }
  func.func @transform_1(%arg0: i32) -> (i32, i32) {
    %c0_i32 = arith.constant 0 : i32
    %c0_i32_0 = arith.constant 0 : i32
    %c0_i32_1 = arith.constant 0 : i32
    return %c0_i32, %c0_i32_0 : i32, i32
  }
  func.func @transform_2(%arg0: i32) -> (i32, i32) {
    %c0_i32 = arith.constant 0 : i32
    %c0_i32_0 = arith.constant 0 : i32
    %c0_i32_1 = arith.constant 0 : i32
    return %c0_i32, %c0_i32_0 : i32, i32
  }
  func.func @transform_3(%arg0: i32) -> (i32, i32) {
    %c0_i32 = arith.constant 0 : i32
    %c0_i32_0 = arith.constant 0 : i32
    %c0_i32_1 = arith.constant 0 : i32
    return %c0_i32, %c0_i32_0 : i32, i32
  }
  func.func @transform_4(%arg0: i32) -> (i32, i32, i32) {
    %c0_i32 = arith.constant 0 : i32
    %c0_i32_0 = arith.constant 0 : i32
    %c0_i32_1 = arith.constant 0 : i32
    %c0_i32_2 = arith.constant 0 : i32
    return %c0_i32, %c0_i32_0, %c0_i32_1 : i32, i32, i32
  }
  func.func @transform_5(%arg0: i32) -> (i32, i32) {
    %c0_i32 = arith.constant 0 : i32
    %c0_i32_0 = arith.constant 0 : i32
    %c0_i32_1 = arith.constant 0 : i32
    return %c0_i32, %c0_i32_0 : i32, i32
  }
}

</mosaic_0001>

<llo_original>
// kernel: _impl.1
$region0: #{_impl.1}
  #allocation0 [shape = 'u32[]', space=smem, size = 0x4, offset = 0x4, fixed_abs, tag = 'smem constant byte address 0x4 - core index']
  #allocation1 [shape = 'u32[144,128]{1,0:T(1,128)}', space=vmem, size = 0x12000, scoped, tag = 'internal scratch']
  %s0 = inlined_call_operand.vmem [shape: f32[8,24], index: 0, kind: input, shape index: {}]
  %s1 = inlined_call_operand.hbm [shape: f32[24,64], index: 1, kind: input, shape index: {}]
  %s2 = inlined_call_operand.hbm [shape: f32[64,64], index: 2, kind: input, shape index: {}]
  %s3 = inlined_call_operand.hbm [shape: f32[64,128], index: 3, kind: input, shape index: {}]
  %s4 = inlined_call_operand.vmem [shape: f32[3,1,128], index: 4, kind: input, shape index: {}]
  %s5 = inlined_call_operand.vmem [shape: f32[8,128], index: 5, kind: output, shape index: {}]
  %s6 = sld [smem:[#allocation0]]
  $region42: #{_impl.1} parent=0
    _
  %s8 = ssub.s32 1, %s6
  %s9 = scalar_select 0, %s8, %s6
  $region1: #{_impl.1} parent=0
    #allocation2 [shape = 'u8[12288]{0}', space=vmem, size = 0x3000, scoped, tag = 'input window, operand 1, single buffered']
    #allocation3 [shape = 's32[1]{0}', space=sflag, size = 0x4, scoped, tag = 'scoped memory for _impl.1']
    #allocation4 [shape = 'u8[32768]{0}', space=vmem, size = 0x8000, scoped, tag = 'input window, operand 2, single buffered']
    #allocation5 [shape = 's32[1]{0}', space=sflag, size = 0x4, scoped, tag = 'scoped memory for _impl.1']
    #allocation6 [shape = 'u8[32768]{0}', space=vmem, size = 0x8000, scoped, tag = 'input window, operand 3, single buffered']
    %10 = vsyncpa [#allocation3], 0
    %11 = vsyncpa [#allocation5], 0
    // Predicated region
    $region2: #{_impl.1} parent=1 // pred_check
      _
    $region3: #{_impl.1} parent=1 // pred_check_branch
      %13 = sbr.rel (0) target = $region5
    $region4: #{_impl.1} parent=1 // pred_region
      _
    $region5: #{_impl.1} parent=1 // pred_fallthru
      _
    // Predicated region
    $region6: #{_impl.1} parent=1 // pred_check
      _
    $region7: #{_impl.1} parent=1 // pred_check_branch
      %15 = sbr.rel (0) target = $region9
    $region8: #{_impl.1} parent=1 // pred_region
      %s17 = ssub.s32 384, 384
      %18 = vsyncadd [#allocation3], %s17
      %s19 = sshll.u32 [#allocation2], 4
      %s20 = int_to_ptr.vmem [resolvable:$true] %s19
      %25 = dma.hbm_to_vmem [thread:$0]  %s1, 384, %s20, [#allocation3], 128, 128, 8
    $region9: #{_impl.1} parent=1 // pred_fallthru
      _
    // Predicated region
    $region10: #{_impl.1} parent=1 // pred_check
      _
    $region11: #{_impl.1} parent=1 // pred_check_branch
      %27 = sbr.rel (0) target = $region13
    $region12: #{_impl.1} parent=1 // pred_region
      %s29 = ssub.s32 1024, 1024
      %30 = vsyncadd [#allocation5], %s29
      %s31 = sshll.u32 [#allocation4], 4
      %s32 = int_to_ptr.vmem [resolvable:$true] %s31
      %37 = dma.hbm_to_vmem [thread:$0]  %s2, 1024, %s32, [#allocation5], 128, 128, 8
    $region13: #{_impl.1} parent=1 // pred_fallthru
      _
    // Predicated region
    $region14: #{_impl.1} parent=1 // pred_check
      _
    $region15: #{_impl.1} parent=1 // pred_check_branch
      %39 = sbr.rel (0) target = $region17
    $region16: #{_impl.1} parent=1 // pred_region
      %s41 = ssub.s32 1024, 1024
      %42 = vsyncadd [#allocation5], %s41
      %s43 = sshll.u32 [#allocation6], 4
      %s44 = int_to_ptr.vmem [resolvable:$true] %s43
      %49 = dma.hbm_to_vmem [thread:$0]  %s3, 1024, %s44, [#allocation5], 128, 128, 8
    $region17: #{_impl.1} parent=1 // pred_fallthru
      _
    // Predicated region
    $region18: #{_impl.1} parent=1 // pred_check
      _
    $region19: #{_impl.1} parent=1 // pred_check_branch
      %51 = sbr.rel (0) target = $region21
    $region20: #{_impl.1} parent=1 // pred_region
      _
    $region21: #{_impl.1} parent=1 // pred_fallthru
      _
    // Predicated region
    $region22: #{_impl.1} parent=1 // pred_check
      _
    $region23: #{_impl.1} parent=1 // pred_check_branch
      %53 = sbr.rel (0) target = $region25
    $region24: #{_impl.1} parent=1 // pred_region
      %54 = dma.done [#allocation3], 384
    $region25: #{_impl.1} parent=1 // pred_fallthru
      _
    // Predicated region
    $region26: #{_impl.1} parent=1 // pred_check
      _
    $region27: #{_impl.1} parent=1 // pred_check_branch
      %56 = sbr.rel (0) target = $region29
    $region28: #{_impl.1} parent=1 // pred_region
      %57 = dma.done [#allocation5], 1024
    $region29: #{_impl.1} parent=1 // pred_fallthru
      _
    // Predicated region
    $region30: #{_impl.1} parent=1 // pred_check
      _
    $region31: #{_impl.1} parent=1 // pred_check_branch
      %59 = sbr.rel (0) target = $region33
    $region32: #{_impl.1} parent=1 // pred_region
      %60 = dma.done [#allocation5], 1024
    $region33: #{_impl.1} parent=1 // pred_fallthru
      _
    %v61 = vld [vmem:[%s0] sm:$0xff]
    %v62 = vld [vmem:[#allocation2] sm:$0xff]
    %v63 = vld [vmem:[#allocation2 + $0x8] sm:$0xff]
    %v64 = vld [vmem:[#allocation2 + $0x10] sm:$0xff]
    %v65 = vld [vmem:[%s4] sm:$0x1]
    %v67 = vlaneseq
    %v68 = vshrl.u32 %v67, 7
    %v69 = vsub.s32 0, %v68
    %v70 = vrot.slane %v65, %v69
    %vm72 = vcmask 195584
    %v74 = vsel %vm72, %v61, 0
    %76 = vmatprep.subr.mxu0 0.0
    %77 = vmatpush1.msra.mxu0 %v62
    %78 = vmatprep.subr.mxu0 0.0
    %79 = vmatpush1.msra.mxu0 %v63
    %80 = vmatprep.subr.mxu0 0.0
    %81 = vmatpush1.msra.mxu0 %v64
    %82 = vmatprep.subr.mxu0 0.0
    %83 = vmatpush1.msra.mxu0 0.0
    %84 = vmatprep.subr.mxu0 0.0
    %85 = vmatpush1.msra.mxu0 0.0
    %86 = vmatprep.subr.mxu0 0.0
    %87 = vmatpush1.msra.mxu0 0.0
    %88 = vmatprep.subr.mxu0 0.0
    %89 = vmatpush1.msra.mxu0 0.0
    %90 = vmatprep.subr.mxu0 0.0
    %91 = vmatpush1.msra.mxu0 0.0
    %92 = vmatprep.subr.mxu0 0.0
    %93 = vmatpush1.msra.mxu0 0.0
    %94 = vmatprep.subr.mxu0 0.0
    %95 = vmatpush1.msra.mxu0 0.0
    %96 = vmatprep.subr.mxu0 0.0
    %97 = vmatpush1.msra.mxu0 0.0
    %98 = vmatprep.subr.mxu0 0.0
    %99 = vmatpush1.msra.mxu0 0.0
    %100 = vmatprep.subr.mxu0 0.0
    %101 = vmatpush1.msra.mxu0 0.0
    %102 = vmatprep.subr.mxu0 0.0
    %103 = vmatpush1.msra.mxu0 0.0
    %104 = vmatprep.subr.mxu0 0.0
    %105 = vmatpush1.msra.mxu0 0.0
    %106 = vmatprep.subr.mxu0 0.0
    %107 = vmatpush1.msra.mxu0 0.0
    %108 = vmatprep.subr.mxu0 0.0
    %109 = vmatpush1.msra.mxu0 0.0
    %110 = vmatprep.subr.mxu0 0.0
    %111 = vmatpush1.msra.mxu0 0.0
    %112 = vmatprep.subr.mxu0 0.0
    %113 = vmatpush1.msra.mxu0 0.0
    %114 = vmatprep.subr.mxu0 0.0
    %115 = vmatpush1.msra.mxu0 0.0
    %116 = vmatprep.subr.mxu0 0.0
    %117 = vmatpush1.msra.mxu0 0.0
    %118 = vmatprep.subr.mxu0 0.0
    %119 = vmatpush1.msra.mxu0 0.0
    %120 = vmatprep.subr.mxu0 0.0
    %121 = vmatpush1.msra.mxu0 0.0
    %122 = vmatprep.subr.mxu0 0.0
    %123 = vmatpush1.msra.mxu0 0.0
    %124 = vmatprep.subr.mxu0 0.0
    %125 = vmatpush1.msra.mxu0 0.0
    %126 = vmatprep.subr.mxu0 0.0
    %127 = vmatpush1.msra.mxu0 0.0
    %128 = vmatprep.subr.mxu0 0.0
    %129 = vmatpush1.msra.mxu0 0.0
    %130 = vmatprep.subr.mxu0 0.0
    %131 = vmatpush1.msra.mxu0 0.0
    %132 = vmatprep.subr.mxu0 0.0
    %133 = vmatpush1.msra.mxu0 0.0
    %134 = vmatprep.subr.mxu0 0.0
    %135 = vmatpush1.msra.mxu0 0.0
    %136 = vmatprep.subr.mxu0 0.0
    %137 = vmatpush1.msra.mxu0 0.0
    %138 = vmatprep.subr.mxu0 0.0
    %139 = vmatpush1.msra.mxu0 0.0
    %140 = vmatprep.mubr.f32.mxu0 0.0
    %141 = vmatmul.mubr.f32.gmra.mrb[0].mxu0 %v74
    %v142 = vpop.f32.mrb[0].mxu0
    %v143 = vadd.f32 %v70, %v142
    %v144 = vpop.f32.mrb[0].mxu0
    %145 = vdwg.mxu0
    %v146 = vmax.f32 %v143, 0.0
    %v147 = vld [vmem:[#allocation4] sm:$0xff]
    %v148 = vld [vmem:[#allocation4 + $0x8] sm:$0xff]
    %v149 = vld [vmem:[#allocation4 + $0x10] sm:$0xff]
    %v150 = vld [vmem:[#allocation4 + $0x18] sm:$0xff]
    %v151 = vld [vmem:[#allocation4 + $0x20] sm:$0xff]
    %v152 = vld [vmem:[#allocation4 + $0x28] sm:$0xff]
    %v153 = vld [vmem:[#allocation4 + $0x30] sm:$0xff]
    %v154 = vld [vmem:[#allocation4 + $0x38] sm:$0xff]
    %s155 = scalar_lea.vmem %s4, 1
    %v156 = vld [vmem:[%s155] sm:$0x1]
    %v158 = vlaneseq
    %v159 = vshrl.u32 %v158, 7
    %v160 = vsub.s32 0, %v159
    %v161 = vrot.slane %v156, %v160
    %vm163 = vcmask 523264
    %v165 = vsel %vm163, %v146, 0
    %167 = vmatprep.subr.mxu0 0.0
    %168 = vmatpush1.msra.mxu0 %v147
    %169 = vmatprep.subr.mxu0 0.0
    %170 = vmatpush1.msra.mxu0 %v148
    %171 = vmatprep.subr.mxu0 0.0
    %172 = vmatpush1.msra.mxu0 %v149
    %173 = vmatprep.subr.mxu0 0.0
    %174 = vmatpush1.msra.mxu0 %v150
    %175 = vmatprep.subr.mxu0 0.0
    %176 = vmatpush1.msra.mxu0 %v151
    %177 = vmatprep.subr.mxu0 0.0
    %178 = vmatpush1.msra.mxu0 %v152
    %179 = vmatprep.subr.mxu0 0.0
    %180 = vmatpush1.msra.mxu0 %v153
    %181 = vmatprep.subr.mxu0 0.0
    %182 = vmatpush1.msra.mxu0 %v154
    %183 = vmatprep.subr.mxu0 0.0
    %184 = vmatpush1.msra.mxu0 0.0
    %185 = vmatprep.subr.mxu0 0.0
    %186 = vmatpush1.msra.mxu0 0.0
    %187 = vmatprep.subr.mxu0 0.0
    %188 = vmatpush1.msra.mxu0 0.0
    %189 = vmatprep.subr.mxu0 0.0
    %190 = vmatpush1.msra.mxu0 0.0
    %191 = vmatprep.subr.mxu0 0.0
    %192 = vmatpush1.msra.mxu0 0.0
    %193 = vmatprep.subr.mxu0 0.0
    %194 = vmatpush1.msra.mxu0 0.0
    %195 = vmatprep.subr.mxu0 0.0
    %196 = vmatpush1.msra.mxu0 0.0
    %197 = vmatprep.subr.mxu0 0.0
    %198 = vmatpush1.msra.mxu0 0.0
    %199 = vmatprep.subr.mxu0 0.0
    %200 = vmatpush1.msra.mxu0 0.0
    %201 = vmatprep.subr.mxu0 0.0
    %202 = vmatpush1.msra.mxu0 0.0
    %203 = vmatprep.subr.mxu0 0.0
    %204 = vmatpush1.msra.mxu0 0.0
    %205 = vmatprep.subr.mxu0 0.0
    %206 = vmatpush1.msra.mxu0 0.0
    %207 = vmatprep.subr.mxu0 0.0
    %208 = vmatpush1.msra.mxu0 0.0
    %209 = vmatprep.subr.mxu0 0.0
    %210 = vmatpush1.msra.mxu0 0.0
    %211 = vmatprep.subr.mxu0 0.0
    %212 = vmatpush1.msra.mxu0 0.0
    %213 = vmatprep.subr.mxu0 0.0
    %214 = vmatpush1.msra.mxu0 0.0
    %215 = vmatprep.subr.mxu0 0.0
    %216 = vmatpush1.msra.mxu0 0.0
    %217 = vmatprep.subr.mxu0 0.0
    %218 = vmatpush1.msra.mxu0 0.0
    %219 = vmatprep.subr.mxu0 0.0
    %220 = vmatpush1.msra.mxu0 0.0
    %221 = vmatprep.subr.mxu0 0.0
    %222 = vmatpush1.msra.mxu0 0.0
    %223 = vmatprep.subr.mxu0 0.0
    %224 = vmatpush1.msra.mxu0 0.0
    %225 = vmatprep.subr.mxu0 0.0
    %226 = vmatpush1.msra.mxu0 0.0
    %227 = vmatprep.subr.mxu0 0.0
    %228 = vmatpush1.msra.mxu0 0.0
    %229 = vmatprep.subr.mxu0 0.0
    %230 = vmatpush1.msra.mxu0 0.0
    %231 = vmatprep.mubr.f32.mxu0 0.0
    %232 = vmatmul.mubr.f32.gmra.mrb[0].mxu0 %v165
    %v233 = vpop.f32.mrb[0].mxu0
    %v234 = vadd.f32 %v161, %v233
    %v235 = vpop.f32.mrb[0].mxu0
    %236 = vdwg.mxu0
    %v237 = vmax.f32 %v234, 0.0
    %v238 = vld [vmem:[#allocation6] sm:$0xff]
    %v239 = vld [vmem:[#allocation6 + $0x8] sm:$0xff]
    %v240 = vld [vmem:[#allocation6 + $0x10] sm:$0xff]
    %v241 = vld [vmem:[#allocation6 + $0x18] sm:$0xff]
    %v242 = vld [vmem:[#allocation6 + $0x20] sm:$0xff]
    %v243 = vld [vmem:[#allocation6 + $0x28] sm:$0xff]
    %v244 = vld [vmem:[#allocation6 + $0x30] sm:$0xff]
    %v245 = vld [vmem:[#allocation6 + $0x38] sm:$0xff]
    %s246 = scalar_lea.vmem %s4, 2
    %v247 = vld [vmem:[%s246] sm:$0x1]
    %v249 = vlaneseq
    %v250 = vshrl.u32 %v249, 7
    %v251 = vsub.s32 0, %v250
    %v252 = vrot.slane %v247, %v251
    %v255 = vsel %vm163, %v237, 0
    %257 = vmatprep.subr.mxu0 0.0
    %258 = vmatpush1.msra.mxu0 %v238
    %259 = vmatprep.subr.mxu0 0.0
    %260 = vmatpush1.msra.mxu0 %v239
    %261 = vmatprep.subr.mxu0 0.0
    %262 = vmatpush1.msra.mxu0 %v240
    %263 = vmatprep.subr.mxu0 0.0
    %264 = vmatpush1.msra.mxu0 %v241
    %265 = vmatprep.subr.mxu0 0.0
    %266 = vmatpush1.msra.mxu0 %v242
    %267 = vmatprep.subr.mxu0 0.0
    %268 = vmatpush1.msra.mxu0 %v243
    %269 = vmatprep.subr.mxu0 0.0
    %270 = vmatpush1.msra.mxu0 %v244
    %271 = vmatprep.subr.mxu0 0.0
    %272 = vmatpush1.msra.mxu0 %v245
    %273 = vmatprep.subr.mxu0 0.0
    %274 = vmatpush1.msra.mxu0 0.0
    %275 = vmatprep.subr.mxu0 0.0
    %276 = vmatpush1.msra.mxu0 0.0
    %277 = vmatprep.subr.mxu0 0.0
    %278 = vmatpush1.msra.mxu0 0.0
    %279 = vmatprep.subr.mxu0 0.0
    %280 = vmatpush1.msra.mxu0 0.0
    %281 = vmatprep.subr.mxu0 0.0
    %282 = vmatpush1.msra.mxu0 0.0
    %283 = vmatprep.subr.mxu0 0.0
    %284 = vmatpush1.msra.mxu0 0.0
    %285 = vmatprep.subr.mxu0 0.0
    %286 = vmatpush1.msra.mxu0 0.0
    %287 = vmatprep.subr.mxu0 0.0
    %288 = vmatpush1.msra.mxu0 0.0
    %289 = vmatprep.subr.mxu0 0.0
    %290 = vmatpush1.msra.mxu0 0.0
    %291 = vmatprep.subr.mxu0 0.0
    %292 = vmatpush1.msra.mxu0 0.0
    %293 = vmatprep.subr.mxu0 0.0
    %294 = vmatpush1.msra.mxu0 0.0
    %295 = vmatprep.subr.mxu0 0.0
    %296 = vmatpush1.msra.mxu0 0.0
    %297 = vmatprep.subr.mxu0 0.0
    %298 = vmatpush1.msra.mxu0 0.0
    %299 = vmatprep.subr.mxu0 0.0
    %300 = vmatpush1.msra.mxu0 0.0
    %301 = vmatprep.subr.mxu0 0.0
    %302 = vmatpush1.msra.mxu0 0.0
    %303 = vmatprep.subr.mxu0 0.0
    %304 = vmatpush1.msra.mxu0 0.0
    %305 = vmatprep.subr.mxu0 0.0
    %306 = vmatpush1.msra.mxu0 0.0
    %307 = vmatprep.subr.mxu0 0.0
    %308 = vmatpush1.msra.mxu0 0.0
    %309 = vmatprep.subr.mxu0 0.0
    %310 = vmatpush1.msra.mxu0 0.0
    %311 = vmatprep.subr.mxu0 0.0
    %312 = vmatpush1.msra.mxu0 0.0
    %313 = vmatprep.subr.mxu0 0.0
    %314 = vmatpush1.msra.mxu0 0.0
    %315 = vmatprep.subr.mxu0 0.0
    %316 = vmatpush1.msra.mxu0 0.0
    %317 = vmatprep.subr.mxu0 0.0
    %318 = vmatpush1.msra.mxu0 0.0
    %319 = vmatprep.subr.mxu0 0.0
    %320 = vmatpush1.msra.mxu0 0.0
    %321 = vmatprep.mubr.f32.mxu0 0.0
    %322 = vmatmul.mubr.f32.gmra.mrb[0].mxu0 %v255
    %v323 = vpop.f32.mrb[0].mxu0
    %v324 = vadd.f32 %v252, %v323
    %v325 = vpop.f32.mrb[0].mxu0
    %326 = vdwg.mxu0
    %327 = vst [vmem:[%s5] sm:$0xff] %v324
    // Predicated region
    $region34: #{_impl.1} parent=1 // pred_check
      _
    $region35: #{_impl.1} parent=1 // pred_check_branch
      %329 = sbr.rel (0) target = $region37
    $region36: #{_impl.1} parent=1 // pred_region
      _
    $region37: #{_impl.1} parent=1 // pred_fallthru
      _
    // Predicated region
    $region38: #{_impl.1} parent=1 // pred_check
      _
    $region39: #{_impl.1} parent=1 // pred_check_branch
      %331 = sbr.rel (0) target = $region41
    $region40: #{_impl.1} parent=1 // pred_region
      _
    $region41: #{_impl.1} parent=1 // pred_fallthru
      _
    %332 = vsyncpa [#allocation3], 1
    %333 = vsyncpa [#allocation5], 1

</llo_original>
